<compile_context>
chip_gen: v7x
topology: tpu7x:2x2x1
jax: 0.10.0
libtpu: 0.0.40
codegen_flags: <defaults>
</compile_context>

<pallas_src>
import jax
import jax.numpy as jnp
from jax.experimental import pallas as pl
from jax.experimental.pallas import tpu as pltpu

NUM_IN = 33
HIDDEN = 34
NUM_OUT = 1

# Batch tile (multiple of 128). With (8,128) lane padding a (2048, 33) f32
# input block occupies 2048*128*4 = 1 MiB in VMEM; double-buffered input +
# the tiny (16, 128) output buffers + ~1 MiB hidden intermediate is ~4-5 MiB,
# well inside even v5e's 16 MiB scoped default. 2048 also gives v7x's two
# TensorCores an even batch split (e.g. B=20000 -> 10 tiles -> 5 per TC).
DEFAULT_TB = 2048


def _round_up(n, m):
    return ((n + m - 1) // m) * m


def mlp_kernel(x_ref, w1_ref, b1_ref, w2_ref, b2_ref, o_ref):
    # Layer 1 on the MXU: (TB, 33) @ (33, 34), f32 accumulation.
    h = jnp.dot(x_ref[...], w1_ref[...], preferred_element_type=jnp.float32)
    h = jnp.maximum(h + b1_ref[...], 0.0)                       # ReLU, (TB, 34)

    # Layer 2 (34 -> 1): VPU multiply + lane reduction against the (1, 34)
    # weight row. On v5e/v6e this hides under the HBM stream of x; on v7x it
    # could optionally be moved onto the otherwise-idle MXU.
    z = jnp.sum(h * w2_ref[...], axis=-1, keepdims=True)        # (TB, 1)

    # Lane-dense epilogue: relayout the (TB, 1) column to (TB//128, 128) full
    # vregs so the bias add, sigmoid (EUP) and store run ~128x fewer, unmasked
    # ops, and the output DMA writes a dense slab instead of a masked column.
    zd = z.reshape(o_ref.shape)                                  # (TB//128, 128)
    o_ref[...] = jax.nn.sigmoid(zd + b2_ref[0])


def mlp_forward(x, w1, b1, w2_row, b2, tb=DEFAULT_TB):
    """x: (B, ...) flattened to (B, 33); w1: (33, 34); b1: (1, 34);
    w2_row: (1, 34) (PyTorch (out, in) layout); b2: (1,). Returns (B, 1)."""
    x = x.reshape(x.shape[0], -1)            # nn.Flatten
    B, feat = x.shape
    assert feat == NUM_IN, f"expected {NUM_IN} features, got {feat}"

    # Tile selection: multiple of 128 so the lane-dense output tiles are
    # exact; for multi-tile grids keep TB a multiple of 1024 so the output
    # block's sublane dim (TB//128) stays divisible by 8.
    if B <= tb:
        TB = _round_up(B, 128)               # single (possibly partial) tile
    else:
        TB = max(1024, (tb // 1024) * 1024)
    num_tiles = pl.cdiv(B, TB)
    B_pad = num_tiles * TB                   # output slab covers full tiles

    cost = pl.CostEstimate(
        flops=2 * B_pad * NUM_IN * HIDDEN + 2 * B_pad * HIDDEN * NUM_OUT,
        transcendentals=B_pad,               # one exp per sigmoid
        bytes_accessed=(B * NUM_IN + B_pad) * 4
        + (NUM_IN * HIDDEN + 2 * HIDDEN + 1) * 4,
    )

    out2d = pl.pallas_call(
        mlp_kernel,
        out_shape=jax.ShapeDtypeStruct((B_pad // 128, 128), jnp.float32),
        grid=(num_tiles,),
        in_specs=[
            # Stream the batch; the last tile may be a partial block (padding
            # rows compute garbage that is sliced away in the wrapper).
            pl.BlockSpec((TB, NUM_IN), lambda i: (i, 0)),
            # Weights/biases: constant block index -> DMA'd once, then
            # VMEM-resident across all grid iterations.
            pl.BlockSpec((NUM_IN, HIDDEN), lambda i: (0, 0)),
            pl.BlockSpec((1, HIDDEN), lambda i: (0, 0)),
            pl.BlockSpec((1, HIDDEN), lambda i: (0, 0)),
            # Scalar output bias lives in SMEM.
            pl.BlockSpec(memory_space=pltpu.MemorySpace.SMEM),
        ],
        # Lane-dense output slab; block rows are always fully in-bounds.
        out_specs=pl.BlockSpec((TB // 128, 128), lambda i: (i, 0)),
        compiler_params=pltpu.CompilerParams(
            dimension_semantics=("parallel",),
            vmem_limit_bytes=32 * 1024 * 1024,
        ),
        cost_estimate=cost,
    )(x, w1, b1, w2_row, b2)

    # Row-major (B_pad//128, 128) == batch order; drop the padding rows.
    return out2d.reshape(B_pad, 1)[:B]


def init_params(key):
    # Deterministic init mimicking PyTorch nn.Linear default:
    # U[-1/sqrt(fan_in), 1/sqrt(fan_in)].
    k1, k2, k3, k4 = jax.random.split(key, 4)
    bound1 = 1.0 / jnp.sqrt(jnp.float32(NUM_IN))
    bound2 = 1.0 / jnp.sqrt(jnp.float32(HIDDEN))
    w1 = jax.random.uniform(k1, (NUM_IN, HIDDEN), jnp.float32, -bound1, bound1)
    b1 = jax.random.uniform(k2, (1, HIDDEN), jnp.float32, -bound1, bound1)
    # Layer-2 weight kept as a (1, 34) row (== PyTorch (out, in) layout).
    w2_row = jax.random.uniform(k3, (NUM_OUT, HIDDEN), jnp.float32, -bound2, bound2)
    b2 = jax.random.uniform(k4, (NUM_OUT,), jnp.float32, -bound2, bound2)
    return w1, b1, w2_row, b2


def reference(x, w1, b1, w2_row, b2):
    x = x.reshape(x.shape[0], -1)
    h = jnp.maximum(x @ w1 + b1, 0.0)
    return jax.nn.sigmoid(h @ w2_row.T + b2)


if __name__ == "__main__":
    key = jax.random.PRNGKey(0)
    kx, kp = jax.random.split(key)

    batch = 8
    x = jax.random.normal(kx, (batch, NUM_IN), jnp.float32)
    w1, b1, w2_row, b2 = init_params(kp)

    out = jax.block_until_ready(mlp_forward(x, w1, b1, w2_row, b2))
    ref = reference(x, w1, b1, w2_row, b2)
    assert out.shape == (batch, NUM_OUT)
    # 1e-3 tolerance covers possible MXU bf16-pass vs XLA f32 dot differences.
    assert jnp.allclose(out, ref, atol=1e-3, rtol=1e-3), float(
        jnp.max(jnp.abs(out - ref)))

    # Multi-tile path: several grid steps plus a partial last input tile.
    big_b = 20000
    xb = jax.random.normal(kx, (big_b, NUM_IN), jnp.float32)
    out_b = jax.block_until_ready(mlp_forward(xb, w1, b1, w2_row, b2))
    ref_b = reference(xb, w1, b1, w2_row, b2)
    assert out_b.shape == (big_b, NUM_OUT)
    assert jnp.allclose(out_b, ref_b, atol=1e-3, rtol=1e-3), float(
        jnp.max(jnp.abs(out_b - ref_b)))

    print("KERNEL_OK")
</pallas_src>

<mosaic_0001>
module attributes {stable_mosaic.version = 11 : i64} {
  func.func @mlp_kernel(%arg0: i32, %arg1: memref<128x33xf32, #tpu.memory_space<vmem>>, %arg2: memref<33x34xf32, #tpu.memory_space<vmem>>, %arg3: memref<1x34xf32, #tpu.memory_space<vmem>>, %arg4: memref<1x34xf32, #tpu.memory_space<vmem>>, %arg5: memref<1xf32, #tpu.memory_space<smem>>, %arg6: memref<1x128xf32, #tpu.memory_space<vmem>>) attributes {dimension_semantics = [#tpu.dimension_semantics<parallel>], iteration_bounds = array<i64: 1>, scalar_prefetch = 0 : i64, scratch_operands = 0 : i64, tpu.core_type = #tpu.core_type<tc>, window_params = [{transform_indices = @transform_0, window_bounds = array<i64: 128, 33>}, {pipeline_mode = #tpu.pipeline_mode<synchronous>, transform_indices = @transform_1, window_bounds = array<i64: 33, 34>}, {pipeline_mode = #tpu.pipeline_mode<synchronous>, transform_indices = @transform_2, window_bounds = array<i64: 1, 34>}, {pipeline_mode = #tpu.pipeline_mode<synchronous>, transform_indices = @transform_3, window_bounds = array<i64: 1, 34>}, {transform_indices = @transform_4, window_bounds = array<i64: 1>}, {transform_indices = @transform_5, window_bounds = array<i64: 1, 128>}]} {
    %c0 = arith.constant 0 : index
    %c0_0 = arith.constant 0 : index
    %0 = vector.load %arg1[%c0, %c0_0] : memref<128x33xf32, #tpu.memory_space<vmem>>, vector<128x33xf32>
    %c0_1 = arith.constant 0 : index
    %c0_2 = arith.constant 0 : index
    %1 = vector.load %arg2[%c0_1, %c0_2] : memref<33x34xf32, #tpu.memory_space<vmem>>, vector<33x34xf32>
    %cst = arith.constant dense<0.000000e+00> : vector<128x34xf32>
    %2 = tpu.matmul %0, %1, %cst {dimension_numbers = #tpu.dot_dimension_numbers<[1], [0], [0], [1], [0, 0, 1, 1], [], []>} : vector<128x33xf32>, vector<33x34xf32>, vector<128x34xf32> -> vector<128x34xf32>
    %c0_3 = arith.constant 0 : index
    %c0_4 = arith.constant 0 : index
    %3 = vector.load %arg3[%c0_3, %c0_4] : memref<1x34xf32, #tpu.memory_space<vmem>>, vector<1x34xf32>
    %4 = vector.broadcast %3 : vector<1x34xf32> to vector<128x34xf32>
    %5 = arith.addf %2, %4 : vector<128x34xf32>
    %cst_5 = arith.constant 0.000000e+00 : f32
    %6 = vector.broadcast %cst_5 : f32 to vector<128x34xf32>
    %7 = arith.maximumf %5, %6 : vector<128x34xf32>
    %c0_6 = arith.constant 0 : index
    %c0_7 = arith.constant 0 : index
    %8 = vector.load %arg4[%c0_6, %c0_7] : memref<1x34xf32, #tpu.memory_space<vmem>>, vector<1x34xf32>
    %9 = vector.broadcast %8 : vector<1x34xf32> to vector<128x34xf32>
    %10 = arith.mulf %7, %9 : vector<128x34xf32>
    %cst_8 = arith.constant dense<0.000000e+00> : vector<128xf32>
    %11 = vector.multi_reduction <add>, %10, %cst_8 [1] : vector<128x34xf32> to vector<128xf32>
    %12 = vector.shape_cast %11 : vector<128xf32> to vector<128x1xf32>
    %13 = vector.shape_cast %12 : vector<128x1xf32> to vector<1x128xf32>
    %c0_9 = arith.constant 0 : index
    %14 = memref.load %arg5[%c0_9] : memref<1xf32, #tpu.memory_space<smem>>
    %15 = vector.broadcast %14 : f32 to vector<1x128xf32>
    %16 = arith.addf %13, %15 : vector<1x128xf32>
    %17 = arith.negf %16 : vector<1x128xf32>
    %18 = math.exp %17 : vector<1x128xf32>
    %cst_10 = arith.constant 1.000000e+00 : f32
    %19 = vector.broadcast %cst_10 : f32 to vector<1x128xf32>
    %20 = arith.addf %19, %18 : vector<1x128xf32>
    %21 = arith.divf %19, %20 : vector<1x128xf32>
    %c0_11 = arith.constant 0 : index
    %c0_12 = arith.constant 0 : index
    %22 = vector.load %arg6[%c0_11, %c0_12] : memref<1x128xf32, #tpu.memory_space<vmem>>, vector<1x128xf32>
    tpu.vector_store %arg6[%c0_11, %c0_12], %21 {strides = array<i32>} : memref<1x128xf32, #tpu.memory_space<vmem>>, vector<1x128xf32>,
    return
  }
  func.func @transform_0(%arg0: i32) -> (i32, i32) {
    %c0_i32 = arith.constant 0 : i32
    %c0_i32_0 = arith.constant 0 : i32
    return %arg0, %c0_i32 : i32, i32
  }
  func.func @transform_1(%arg0: i32) -> (i32, i32) {
    %c0_i32 = arith.constant 0 : i32
    %c0_i32_0 = arith.constant 0 : i32
    %c0_i32_1 = arith.constant 0 : i32
    return %c0_i32, %c0_i32_0 : i32, i32
  }
  func.func @transform_2(%arg0: i32) -> (i32, i32) {
    %c0_i32 = arith.constant 0 : i32
    %c0_i32_0 = arith.constant 0 : i32
    %c0_i32_1 = arith.constant 0 : i32
    return %c0_i32, %c0_i32_0 : i32, i32
  }
  func.func @transform_3(%arg0: i32) -> (i32, i32) {
    %c0_i32 = arith.constant 0 : i32
    %c0_i32_0 = arith.constant 0 : i32
    %c0_i32_1 = arith.constant 0 : i32
    return %c0_i32, %c0_i32_0 : i32, i32
  }
  func.func @transform_4(%arg0: i32) -> i32 {
    %c0_i32 = arith.constant 0 : i32
    %c0_i32_0 = arith.constant 0 : i32
    return %c0_i32 : i32
  }
  func.func @transform_5(%arg0: i32) -> (i32, i32) {
    %c0_i32 = arith.constant 0 : i32
    %c0_i32_0 = arith.constant 0 : i32
    return %arg0, %c0_i32 : i32, i32
  }
}

</mosaic_0001>

<llo_original>
// kernel: tpu_custom_call.1
$region0: #{tpu_custom_call.1}
  #allocation0 [shape = 'u32[]', space=smem, size = 0x4, offset = 0x4, fixed_abs, tag = 'smem constant byte address 0x4 - core index']
  #allocation1 [shape = 'u32[144,128]{1,0:T(1,128)}', space=vmem, size = 0x12000, scoped, tag = 'internal scratch']
  #allocation2 [shape = 'f32[1]{0:T(128)S(6)}', space=smem, size = 0x200, scoped, tag = 'scoped memory for tpu_custom_call.1']
  %s0 = inlined_call_operand.hbm [shape: f32[8,33], index: 0, kind: input, shape index: {}]
  %s1 = inlined_call_operand.hbm [shape: f32[33,34], index: 1, kind: input, shape index: {}]
  %s2 = inlined_call_operand.vmem [shape: f32[1,34], index: 2, kind: input, shape index: {}]
  %s3 = inlined_call_operand.vmem [shape: f32[1,34], index: 3, kind: input, shape index: {}]
  %s4 = inlined_call_operand.<no memory space> [shape: f32[1], index: 4, kind: input, shape index: {}]
  %s5 = inlined_call_operand.hbm [shape: f32[1,128], index: 5, kind: output, shape index: {}]
  %s6 = sld [smem:[#allocation0]]
  $region38: #{tpu_custom_call.1} parent=0
    _
  %s8 = ssub.s32 1, %s6
  %s9 = scalar_select 0, %s8, %s6
  %10 = sst [smem:[#allocation2]] %s4
  $region1: #{tpu_custom_call.1} parent=0
    #allocation3 [shape = 'u8[65536]{0}', space=vmem, size = 0x10000, scoped, tag = 'input window, operand 0, single buffered']
    #allocation4 [shape = 's32[1]{0}', space=sflag, size = 0x4, scoped, tag = 'scoped memory for tpu_custom_call.1']
    #allocation5 [shape = 's32[1]{0}', space=sflag, size = 0x4, scoped, tag = 'scoped memory for tpu_custom_call.1']
    #allocation6 [shape = 'u8[20480]{0}', space=vmem, size = 0x5000, scoped, tag = 'input window, operand 1, single buffered']
    #allocation7 [shape = 's32[1]{0}', space=sflag, size = 0x4, scoped, tag = 'scoped memory for tpu_custom_call.1']
    #allocation8 [shape = 'u8[512]{0}', space=vmem, size = 0x400, scoped, tag = 'output window, operand 0, single buffered']
    %11 = vsyncpa [#allocation4], 0
    %12 = vsyncpa [#allocation7], 0
    %13 = vsyncpa [#allocation5], 0
    // Predicated region
    $region2: #{tpu_custom_call.1} parent=1 // pred_check
      _
    $region3: #{tpu_custom_call.1} parent=1 // pred_check_branch
      %15 = sbr.rel (0) target = $region5
    $region4: #{tpu_custom_call.1} parent=1 // pred_region
      %s17 = ssub.s32 2048, 128
      %18 = vsyncadd [#allocation4], %s17
      %s19 = sshll.u32 [#allocation3], 4
      %s20 = int_to_ptr.vmem [resolvable:$true] %s19
      %25 = dma.hbm_to_vmem [thread:$0]  %s0, 128, %s20, [#allocation4], 128, 128, 8
    $region5: #{tpu_custom_call.1} parent=1 // pred_fallthru
      _
    // Predicated region
    $region6: #{tpu_custom_call.1} parent=1 // pred_check
      _
    $region7: #{tpu_custom_call.1} parent=1 // pred_check_branch
      %27 = sbr.rel (0) target = $region9
    $region8: #{tpu_custom_call.1} parent=1 // pred_region
      %s29 = ssub.s32 640, 640
      %30 = vsyncadd [#allocation7], %s29
      %s31 = sshll.u32 [#allocation6], 4
      %s32 = int_to_ptr.vmem [resolvable:$true] %s31
      %37 = dma.hbm_to_vmem [thread:$0]  %s1, 640, %s32, [#allocation7], 128, 128, 8
    $region9: #{tpu_custom_call.1} parent=1 // pred_fallthru
      _
    // Predicated region
    $region10: #{tpu_custom_call.1} parent=1 // pred_check
      _
    $region11: #{tpu_custom_call.1} parent=1 // pred_check_branch
      %39 = sbr.rel (0) target = $region13
    $region12: #{tpu_custom_call.1} parent=1 // pred_region
      _
    $region13: #{tpu_custom_call.1} parent=1 // pred_fallthru
      _
    // Predicated region
    $region14: #{tpu_custom_call.1} parent=1 // pred_check
      _
    $region15: #{tpu_custom_call.1} parent=1 // pred_check_branch
      %41 = sbr.rel (0) target = $region17
    $region16: #{tpu_custom_call.1} parent=1 // pred_region
      _
    $region17: #{tpu_custom_call.1} parent=1 // pred_fallthru
      _
    // Predicated region
    $region18: #{tpu_custom_call.1} parent=1 // pred_check
      _
    $region19: #{tpu_custom_call.1} parent=1 // pred_check_branch
      %43 = sbr.rel (0) target = $region21
    $region20: #{tpu_custom_call.1} parent=1 // pred_region
      _
    $region21: #{tpu_custom_call.1} parent=1 // pred_fallthru
      _
    // Predicated region
    $region22: #{tpu_custom_call.1} parent=1 // pred_check
      _
    $region23: #{tpu_custom_call.1} parent=1 // pred_check_branch
      %45 = sbr.rel (0) target = $region25
    $region24: #{tpu_custom_call.1} parent=1 // pred_region
      %46 = dma.done [#allocation4], 2048
    $region25: #{tpu_custom_call.1} parent=1 // pred_fallthru
      _
    // Predicated region
    $region26: #{tpu_custom_call.1} parent=1 // pred_check
      _
    $region27: #{tpu_custom_call.1} parent=1 // pred_check_branch
      %48 = sbr.rel (0) target = $region29
    $region28: #{tpu_custom_call.1} parent=1 // pred_region
      %49 = dma.done [#allocation7], 640
    $region29: #{tpu_custom_call.1} parent=1 // pred_fallthru
      _
    %v50 = vld [vmem:[#allocation3] sm:$0xff]
    %v51 = vld [vmem:[#allocation3 + $0x8] sm:$0xff]
    %v52 = vld [vmem:[#allocation3 + $0x10] sm:$0xff]
    %v53 = vld [vmem:[#allocation3 + $0x18] sm:$0xff]
    %v54 = vld [vmem:[#allocation3 + $0x20] sm:$0xff]
    %v55 = vld [vmem:[#allocation3 + $0x28] sm:$0xff]
    %v56 = vld [vmem:[#allocation3 + $0x30] sm:$0xff]
    %v57 = vld [vmem:[#allocation3 + $0x38] sm:$0xff]
    %v58 = vld [vmem:[#allocation3 + $0x40] sm:$0xff]
    %v59 = vld [vmem:[#allocation3 + $0x48] sm:$0xff]
    %v60 = vld [vmem:[#allocation3 + $0x50] sm:$0xff]
    %v61 = vld [vmem:[#allocation3 + $0x58] sm:$0xff]
    %v62 = vld [vmem:[#allocation3 + $0x60] sm:$0xff]
    %v63 = vld [vmem:[#allocation3 + $0x68] sm:$0xff]
    %v64 = vld [vmem:[#allocation3 + $0x70] sm:$0xff]
    %v65 = vld [vmem:[#allocation3 + $0x78] sm:$0xff]
    %v66 = vld [vmem:[#allocation6] sm:$0xff]
    %v67 = vld [vmem:[#allocation6 + $0x8] sm:$0xff]
    %v68 = vld [vmem:[#allocation6 + $0x10] sm:$0xff]
    %v69 = vld [vmem:[#allocation6 + $0x18] sm:$0xff]
    %v70 = vld [vmem:[#allocation6 + $0x20] sm:$0x1]
    %v71 = vld [vmem:[%s2] sm:$0x1]
    %v73 = vlaneseq
    %v74 = vshrl.u32 %v73, 7
    %v75 = vsub.s32 0, %v74
    %v76 = vrot.slane %v71, %v75
    %vm78 = vcmask 269312
    %v80 = vsel %vm78, %v50, 0
    %v83 = vsel %vm78, %v51, 0
    %v86 = vsel %vm78, %v52, 0
    %v89 = vsel %vm78, %v53, 0
    %v92 = vsel %vm78, %v54, 0
    %v95 = vsel %vm78, %v55, 0
    %v98 = vsel %vm78, %v56, 0
    %v101 = vsel %vm78, %v57, 0
    %v104 = vsel %vm78, %v58, 0
    %v107 = vsel %vm78, %v59, 0
    %v110 = vsel %vm78, %v60, 0
    %v113 = vsel %vm78, %v61, 0
    %v116 = vsel %vm78, %v62, 0
    %v119 = vsel %vm78, %v63, 0
    %v122 = vsel %vm78, %v64, 0
    %v125 = vsel %vm78, %v65, 0
    %vm127 = vcmask 1040384
    %v129 = vsel %vm127, %v70, 0
    %131 = vmatprep.subr.mxu0 0.0
    %132 = vmatpush1.msra.mxu0 %v66
    %133 = vmatprep.subr.mxu0 0.0
    %134 = vmatpush1.msra.mxu0 %v67
    %135 = vmatprep.subr.mxu0 0.0
    %136 = vmatpush1.msra.mxu0 %v68
    %137 = vmatprep.subr.mxu0 0.0
    %138 = vmatpush1.msra.mxu0 %v69
    %139 = vmatprep.subr.mxu0 0.0
    %140 = vmatpush1.msra.mxu0 %v129
    %141 = vmatprep.subr.mxu0 0.0
    %142 = vmatpush1.msra.mxu0 0.0
    %143 = vmatprep.subr.mxu0 0.0
    %144 = vmatpush1.msra.mxu0 0.0
    %145 = vmatprep.subr.mxu0 0.0
    %146 = vmatpush1.msra.mxu0 0.0
    %147 = vmatprep.subr.mxu0 0.0
    %148 = vmatpush1.msra.mxu0 0.0
    %149 = vmatprep.subr.mxu0 0.0
    %150 = vmatpush1.msra.mxu0 0.0
    %151 = vmatprep.subr.mxu0 0.0
    %152 = vmatpush1.msra.mxu0 0.0
    %153 = vmatprep.subr.mxu0 0.0
    %154 = vmatpush1.msra.mxu0 0.0
    %155 = vmatprep.subr.mxu0 0.0
    %156 = vmatpush1.msra.mxu0 0.0
    %157 = vmatprep.subr.mxu0 0.0
    %158 = vmatpush1.msra.mxu0 0.0
    %159 = vmatprep.subr.mxu0 0.0
    %160 = vmatpush1.msra.mxu0 0.0
    %161 = vmatprep.subr.mxu0 0.0
    %162 = vmatpush1.msra.mxu0 0.0
    %163 = vmatprep.subr.mxu0 0.0
    %164 = vmatpush1.msra.mxu0 0.0
    %165 = vmatprep.subr.mxu0 0.0
    %166 = vmatpush1.msra.mxu0 0.0
    %167 = vmatprep.subr.mxu0 0.0
    %168 = vmatpush1.msra.mxu0 0.0
    %169 = vmatprep.subr.mxu0 0.0
    %170 = vmatpush1.msra.mxu0 0.0
    %171 = vmatprep.subr.mxu0 0.0
    %172 = vmatpush1.msra.mxu0 0.0
    %173 = vmatprep.subr.mxu0 0.0
    %174 = vmatpush1.msra.mxu0 0.0
    %175 = vmatprep.subr.mxu0 0.0
    %176 = vmatpush1.msra.mxu0 0.0
    %177 = vmatprep.subr.mxu0 0.0
    %178 = vmatpush1.msra.mxu0 0.0
    %179 = vmatprep.subr.mxu0 0.0
    %180 = vmatpush1.msra.mxu0 0.0
    %181 = vmatprep.subr.mxu0 0.0
    %182 = vmatpush1.msra.mxu0 0.0
    %183 = vmatprep.subr.mxu0 0.0
    %184 = vmatpush1.msra.mxu0 0.0
    %185 = vmatprep.subr.mxu0 0.0
    %186 = vmatpush1.msra.mxu0 0.0
    %187 = vmatprep.subr.mxu0 0.0
    %188 = vmatpush1.msra.mxu0 0.0
    %189 = vmatprep.subr.mxu0 0.0
    %190 = vmatpush1.msra.mxu0 0.0
    %191 = vmatprep.subr.mxu0 0.0
    %192 = vmatpush1.msra.mxu0 0.0
    %193 = vmatprep.subr.mxu0 0.0
    %194 = vmatpush1.msra.mxu0 0.0
    %195 = vmatprep.mubr.f32.mxu0 0.0
    %196 = vmatmul.mubr.f32.gmra.mrb[0].mxu0 %v80
    %v197 = vpop.f32.mrb[0].mxu0
    %v198 = vadd.f32 %v76, %v197
    %v199 = vpop.f32.mrb[0].mxu0
    %200 = vmatprep.mubr.f32.mxu0 0.0
    %201 = vmatmul.mubr.f32.gmra.mrb[0].mxu0 %v83
    %v202 = vpop.f32.mrb[0].mxu0
    %v203 = vadd.f32 %v76, %v202
    %v204 = vpop.f32.mrb[0].mxu0
    %205 = vmatprep.mubr.f32.mxu0 0.0
    %206 = vmatmul.mubr.f32.gmra.mrb[0].mxu0 %v86
    %v207 = vpop.f32.mrb[0].mxu0
    %v208 = vadd.f32 %v76, %v207
    %v209 = vpop.f32.mrb[0].mxu0
    %210 = vmatprep.mubr.f32.mxu0 0.0
    %211 = vmatmul.mubr.f32.gmra.mrb[0].mxu0 %v89
    %v212 = vpop.f32.mrb[0].mxu0
    %v213 = vadd.f32 %v76, %v212
    %v214 = vpop.f32.mrb[0].mxu0
    %215 = vmatprep.mubr.f32.mxu0 0.0
    %216 = vmatmul.mubr.f32.gmra.mrb[0].mxu0 %v92
    %v217 = vpop.f32.mrb[0].mxu0
    %v218 = vadd.f32 %v76, %v217
    %v219 = vpop.f32.mrb[0].mxu0
    %220 = vmatprep.mubr.f32.mxu0 0.0
    %221 = vmatmul.mubr.f32.gmra.mrb[0].mxu0 %v95
    %v222 = vpop.f32.mrb[0].mxu0
    %v223 = vadd.f32 %v76, %v222
    %v224 = vpop.f32.mrb[0].mxu0
    %225 = vmatprep.mubr.f32.mxu0 0.0
    %226 = vmatmul.mubr.f32.gmra.mrb[0].mxu0 %v98
    %v227 = vpop.f32.mrb[0].mxu0
    %v228 = vadd.f32 %v76, %v227
    %v229 = vpop.f32.mrb[0].mxu0
    %230 = vmatprep.mubr.f32.mxu0 0.0
    %231 = vmatmul.mubr.f32.gmra.mrb[0].mxu0 %v101
    %v232 = vpop.f32.mrb[0].mxu0
    %v233 = vadd.f32 %v76, %v232
    %v234 = vpop.f32.mrb[0].mxu0
    %235 = vmatprep.mubr.f32.mxu0 0.0
    %236 = vmatmul.mubr.f32.gmra.mrb[0].mxu0 %v104
    %v237 = vpop.f32.mrb[0].mxu0
    %v238 = vadd.f32 %v76, %v237
    %v239 = vpop.f32.mrb[0].mxu0
    %240 = vmatprep.mubr.f32.mxu0 0.0
    %241 = vmatmul.mubr.f32.gmra.mrb[0].mxu0 %v107
    %v242 = vpop.f32.mrb[0].mxu0
    %v243 = vadd.f32 %v76, %v242
    %v244 = vpop.f32.mrb[0].mxu0
    %245 = vmatprep.mubr.f32.mxu0 0.0
    %246 = vmatmul.mubr.f32.gmra.mrb[0].mxu0 %v110
    %v247 = vpop.f32.mrb[0].mxu0
    %v248 = vadd.f32 %v76, %v247
    %v249 = vpop.f32.mrb[0].mxu0
    %250 = vmatprep.mubr.f32.mxu0 0.0
    %251 = vmatmul.mubr.f32.gmra.mrb[0].mxu0 %v113
    %v252 = vpop.f32.mrb[0].mxu0
    %v253 = vadd.f32 %v76, %v252
    %v254 = vpop.f32.mrb[0].mxu0
    %255 = vmatprep.mubr.f32.mxu0 0.0
    %256 = vmatmul.mubr.f32.gmra.mrb[0].mxu0 %v116
    %v257 = vpop.f32.mrb[0].mxu0
    %v258 = vadd.f32 %v76, %v257
    %v259 = vpop.f32.mrb[0].mxu0
    %260 = vmatprep.mubr.f32.mxu0 0.0
    %261 = vmatmul.mubr.f32.gmra.mrb[0].mxu0 %v119
    %v262 = vpop.f32.mrb[0].mxu0
    %v263 = vadd.f32 %v76, %v262
    %v264 = vpop.f32.mrb[0].mxu0
    %265 = vmatprep.mubr.f32.mxu0 0.0
    %266 = vmatmul.mubr.f32.gmra.mrb[0].mxu0 %v122
    %v267 = vpop.f32.mrb[0].mxu0
    %v268 = vadd.f32 %v76, %v267
    %v269 = vpop.f32.mrb[0].mxu0
    %270 = vmatprep.mubr.f32.mxu0 0.0
    %271 = vmatmul.mubr.f32.gmra.mrb[0].mxu0 %v125
    %v272 = vpop.f32.mrb[0].mxu0
    %v273 = vadd.f32 %v76, %v272
    %v274 = vpop.f32.mrb[0].mxu0
    %275 = vdwg.mxu0
    %v276 = vmax.f32 %v198, 0.0
    %v277 = vmax.f32 %v203, 0.0
    %v278 = vmax.f32 %v208, 0.0
    %v279 = vmax.f32 %v213, 0.0
    %v280 = vmax.f32 %v218, 0.0
    %v281 = vmax.f32 %v223, 0.0
    %v282 = vmax.f32 %v228, 0.0
    %v283 = vmax.f32 %v233, 0.0
    %v284 = vmax.f32 %v238, 0.0
    %v285 = vmax.f32 %v243, 0.0
    %v286 = vmax.f32 %v248, 0.0
    %v287 = vmax.f32 %v253, 0.0
    %v288 = vmax.f32 %v258, 0.0
    %v289 = vmax.f32 %v263, 0.0
    %v290 = vmax.f32 %v268, 0.0
    %v291 = vmax.f32 %v273, 0.0
    %v292 = vld [vmem:[%s3] sm:$0x1]
    %v294 = vlaneseq
    %v295 = vshrl.u32 %v294, 7
    %v296 = vsub.s32 0, %v295
    %v297 = vrot.slane %v292, %v296
    %v299 = vmul.f32 %v276, %v297
    %v300 = vmul.f32 %v277, %v297
    %v301 = vmul.f32 %v278, %v297
    %v302 = vmul.f32 %v279, %v297
    %v303 = vmul.f32 %v280, %v297
    %v304 = vmul.f32 %v281, %v297
    %v305 = vmul.f32 %v282, %v297
    %v306 = vmul.f32 %v283, %v297
    %v307 = vmul.f32 %v284, %v297
    %v308 = vmul.f32 %v285, %v297
    %v309 = vmul.f32 %v286, %v297
    %v310 = vmul.f32 %v287, %v297
    %v311 = vmul.f32 %v288, %v297
    %v312 = vmul.f32 %v289, %v297
    %v313 = vmul.f32 %v290, %v297
    %v314 = vmul.f32 %v291, %v297
    %vm315 = vcmask 277504
    %v316 = vsel %vm315, %v299, 0.0
    %317 = vadd.xlane.f32.xlu0 %v316
    %v318 = vpop.xlane.xlu0 %317
    %v319 = vsel %vm315, %v300, 0.0
    %320 = vadd.xlane.f32.xlu0 %v319
    %v321 = vpop.xlane.xlu0 %320
    %v322 = vsel %vm315, %v301, 0.0
    %323 = vadd.xlane.f32.xlu0 %v322
    %v324 = vpop.xlane.xlu0 %323
    %v325 = vsel %vm315, %v302, 0.0
    %326 = vadd.xlane.f32.xlu0 %v325
    %v327 = vpop.xlane.xlu0 %326
    %v328 = vsel %vm315, %v303, 0.0
    %329 = vadd.xlane.f32.xlu0 %v328
    %v330 = vpop.xlane.xlu0 %329
    %v331 = vsel %vm315, %v304, 0.0
    %332 = vadd.xlane.f32.xlu0 %v331
    %v333 = vpop.xlane.xlu0 %332
    %v334 = vsel %vm315, %v305, 0.0
    %335 = vadd.xlane.f32.xlu0 %v334
    %v336 = vpop.xlane.xlu0 %335
    %v337 = vsel %vm315, %v306, 0.0
    %338 = vadd.xlane.f32.xlu0 %v337
    %v339 = vpop.xlane.xlu0 %338
    %v340 = vsel %vm315, %v307, 0.0
    %341 = vadd.xlane.f32.xlu0 %v340
    %v342 = vpop.xlane.xlu0 %341
    %v343 = vsel %vm315, %v308, 0.0
    %344 = vadd.xlane.f32.xlu0 %v343
    %v345 = vpop.xlane.xlu0 %344
    %v346 = vsel %vm315, %v309, 0.0
    %347 = vadd.xlane.f32.xlu0 %v346
    %v348 = vpop.xlane.xlu0 %347
    %v349 = vsel %vm315, %v310, 0.0
    %350 = vadd.xlane.f32.xlu0 %v349
    %v351 = vpop.xlane.xlu0 %350
    %v352 = vsel %vm315, %v311, 0.0
    %353 = vadd.xlane.f32.xlu0 %v352
    %v354 = vpop.xlane.xlu0 %353
    %v355 = vsel %vm315, %v312, 0.0
    %356 = vadd.xlane.f32.xlu0 %v355
    %v357 = vpop.xlane.xlu0 %356
    %v358 = vsel %vm315, %v313, 0.0
    %359 = vadd.xlane.f32.xlu0 %v358
    %v360 = vpop.xlane.xlu0 %359
    %v361 = vsel %vm315, %v314, 0.0
    %362 = vadd.xlane.f32.xlu0 %v361
    %v363 = vpop.xlane.xlu0 %362
    %s364 = sld [smem:[#allocation2]]
    %v365 = vstv %s364
    %v366 = vadd.f32 %v318, %v365
    %v367 = vadd.f32 %v321, %v365
    %v368 = vadd.f32 %v324, %v365
    %v369 = vadd.f32 %v327, %v365
    %v370 = vadd.f32 %v330, %v365
    %v371 = vadd.f32 %v333, %v365
    %v372 = vadd.f32 %v336, %v365
    %v373 = vadd.f32 %v339, %v365
    %v374 = vadd.f32 %v342, %v365
    %v375 = vadd.f32 %v345, %v365
    %v376 = vadd.f32 %v348, %v365
    %v377 = vadd.f32 %v351, %v365
    %v378 = vadd.f32 %v354, %v365
    %v379 = vadd.f32 %v357, %v365
    %v380 = vadd.f32 %v360, %v365
    %v381 = vadd.f32 %v363, %v365
    %v382 = vxor.u32 %v366, 2147483648
    %v383 = vxor.u32 %v367, 2147483648
    %v384 = vxor.u32 %v368, 2147483648
    %v385 = vxor.u32 %v369, 2147483648
    %v386 = vxor.u32 %v370, 2147483648
    %v387 = vxor.u32 %v371, 2147483648
    %v388 = vxor.u32 %v372, 2147483648
    %v389 = vxor.u32 %v373, 2147483648
    %v390 = vxor.u32 %v374, 2147483648
    %v391 = vxor.u32 %v375, 2147483648
    %v392 = vxor.u32 %v376, 2147483648
    %v393 = vxor.u32 %v377, 2147483648
    %v394 = vxor.u32 %v378, 2147483648
    %v395 = vxor.u32 %v379, 2147483648
    %v396 = vxor.u32 %v380, 2147483648
    %v397 = vxor.u32 %v381, 2147483648
    %v398 = vmul.f32 %v382, 1.442695
    %v399 = vpow.pop %v398
    %v400 = vmul.f32 %v383, 1.442695
    %v401 = vpow.pop %v400
    %v402 = vmul.f32 %v384, 1.442695
    %v403 = vpow.pop %v402
    %v404 = vmul.f32 %v385, 1.442695
    %v405 = vpow.pop %v404
    %v406 = vmul.f32 %v386, 1.442695
    %v407 = vpow.pop %v406
    %v408 = vmul.f32 %v387, 1.442695
    %v409 = vpow.pop %v408
    %v410 = vmul.f32 %v388, 1.442695
    %v411 = vpow.pop %v410
    %v412 = vmul.f32 %v389, 1.442695
    %v413 = vpow.pop %v412
    %v414 = vmul.f32 %v390, 1.442695
    %v415 = vpow.pop %v414
    %v416 = vmul.f32 %v391, 1.442695
    %v417 = vpow.pop %v416
    %v418 = vmul.f32 %v392, 1.442695
    %v419 = vpow.pop %v418
    %v420 = vmul.f32 %v393, 1.442695
    %v421 = vpow.pop %v420
    %v422 = vmul.f32 %v394, 1.442695
    %v423 = vpow.pop %v422
    %v424 = vmul.f32 %v395, 1.442695
    %v425 = vpow.pop %v424
    %v426 = vmul.f32 %v396, 1.442695
    %v427 = vpow.pop %v426
    %v428 = vmul.f32 %v397, 1.442695
    %v429 = vpow.pop %v428
    %v430 = vadd.f32 %v399, 1.0
    %v431 = vadd.f32 %v401, 1.0
    %v432 = vadd.f32 %v403, 1.0
    %v433 = vadd.f32 %v405, 1.0
    %v434 = vadd.f32 %v407, 1.0
    %v435 = vadd.f32 %v409, 1.0
    %v436 = vadd.f32 %v411, 1.0
    %v437 = vadd.f32 %v413, 1.0
    %v438 = vadd.f32 %v415, 1.0
    %v439 = vadd.f32 %v417, 1.0
    %v440 = vadd.f32 %v419, 1.0
    %v441 = vadd.f32 %v421, 1.0
    %v442 = vadd.f32 %v423, 1.0
    %v443 = vadd.f32 %v425, 1.0
    %v444 = vadd.f32 %v427, 1.0
    %v445 = vadd.f32 %v429, 1.0
    %v446 = vrcp.pop %v430
    %v447 = vmul.f32 1.0, %v446
    %v448 = vrcp.pop %v431
    %v449 = vmul.f32 1.0, %v448
    %v450 = vrcp.pop %v432
    %v451 = vmul.f32 1.0, %v450
    %v452 = vrcp.pop %v433
    %v453 = vmul.f32 1.0, %v452
    %v454 = vrcp.pop %v434
    %v455 = vmul.f32 1.0, %v454
    %v456 = vrcp.pop %v435
    %v457 = vmul.f32 1.0, %v456
    %v458 = vrcp.pop %v436
    %v459 = vmul.f32 1.0, %v458
    %v460 = vrcp.pop %v437
    %v461 = vmul.f32 1.0, %v460
    %v462 = vrcp.pop %v438
    %v463 = vmul.f32 1.0, %v462
    %v464 = vrcp.pop %v439
    %v465 = vmul.f32 1.0, %v464
    %v466 = vrcp.pop %v440
    %v467 = vmul.f32 1.0, %v466
    %v468 = vrcp.pop %v441
    %v469 = vmul.f32 1.0, %v468
    %v470 = vrcp.pop %v442
    %v471 = vmul.f32 1.0, %v470
    %v472 = vrcp.pop %v443
    %v473 = vmul.f32 1.0, %v472
    %v474 = vrcp.pop %v444
    %v475 = vmul.f32 1.0, %v474
    %v476 = vrcp.pop %v445
    %v477 = vmul.f32 1.0, %v476
    %v494 = vlaneseq
    %v495 = vand.u32 %v494, 127
    %v496 = vlaneseq
    %v497 = vshrl.u32 %v496, 7
    %v498 = vsub.s32 %v495, %v497
    %v499 = vrot.slane %v447, %v498
    %v500 = vadd.s32 %v495, 4294967288
    %v501 = vlaneseq
    %v502 = vshrl.u32 %v501, 7
    %v503 = vsub.s32 %v500, %v502
    %v504 = vrot.slane %v449, %v503
    %vm505 = vcmask 130112
    %v506 = vsel %vm505, %v504, %v499
    %v507 = vadd.s32 %v495, 4294967280
    %v508 = vlaneseq
    %v509 = vshrl.u32 %v508, 7
    %v510 = vsub.s32 %v507, %v509
    %v511 = vrot.slane %v451, %v510
    %vm512 = vcmask 195712
    %v513 = vsel %vm512, %v511, %v506
    %v514 = vadd.s32 %v495, 4294967272
    %v515 = vlaneseq
    %v516 = vshrl.u32 %v515, 7
    %v517 = vsub.s32 %v514, %v516
    %v518 = vrot.slane %v453, %v517
    %vm519 = vcmask 261312
    %v520 = vsel %vm519, %v518, %v513
    %v521 = vadd.s32 %v495, 4294967264
    %v522 = vlaneseq
    %v523 = vshrl.u32 %v522, 7
    %v524 = vsub.s32 %v521, %v523
    %v525 = vrot.slane %v455, %v524
    %vm526 = vcmask 326912
    %v527 = vsel %vm526, %v525, %v520
    %v528 = vadd.s32 %v495, 4294967256
    %v529 = vlaneseq
    %v530 = vshrl.u32 %v529, 7
    %v531 = vsub.s32 %v528, %v530
    %v532 = vrot.slane %v457, %v531
    %vm533 = vcmask 392512
    %v534 = vsel %vm533, %v532, %v527
    %v535 = vadd.s32 %v495, 4294967248
    %v536 = vlaneseq
    %v537 = vshrl.u32 %v536, 7
    %v538 = vsub.s32 %v535, %v537
    %v539 = vrot.slane %v459, %v538
    %vm540 = vcmask 458112
    %v541 = vsel %vm540, %v539, %v534
    %v542 = vadd.s32 %v495, 4294967240
    %v543 = vlaneseq
    %v544 = vshrl.u32 %v543, 7
    %v545 = vsub.s32 %v542, %v544
    %v546 = vrot.slane %v461, %v545
    %vm547 = vcmask 523712
    %v548 = vsel %vm547, %v546, %v541
    %v549 = vadd.s32 %v495, 4294967232
    %v550 = vlaneseq
    %v551 = vshrl.u32 %v550, 7
    %v552 = vsub.s32 %v549, %v551
    %v553 = vrot.slane %v463, %v552
    %vm554 = vcmask 589312
    %v555 = vsel %vm554, %v553, %v548
    %v556 = vadd.s32 %v495, 4294967224
    %v557 = vlaneseq
    %v558 = vshrl.u32 %v557, 7
    %v559 = vsub.s32 %v556, %v558
    %v560 = vrot.slane %v465, %v559
    %vm561 = vcmask 654912
    %v562 = vsel %vm561, %v560, %v555
    %v563 = vadd.s32 %v495, 4294967216
    %v564 = vlaneseq
    %v565 = vshrl.u32 %v564, 7
    %v566 = vsub.s32 %v563, %v565
    %v567 = vrot.slane %v467, %v566
    %vm568 = vcmask 720512
    %v569 = vsel %vm568, %v567, %v562
    %v570 = vadd.s32 %v495, 4294967208
    %v571 = vlaneseq
    %v572 = vshrl.u32 %v571, 7
    %v573 = vsub.s32 %v570, %v572
    %v574 = vrot.slane %v469, %v573
    %vm575 = vcmask 786112
    %v576 = vsel %vm575, %v574, %v569
    %v577 = vadd.s32 %v495, 4294967200
    %v578 = vlaneseq
    %v579 = vshrl.u32 %v578, 7
    %v580 = vsub.s32 %v577, %v579
    %v581 = vrot.slane %v471, %v580
    %vm582 = vcmask 851712
    %v583 = vsel %vm582, %v581, %v576
    %v584 = vadd.s32 %v495, 4294967192
    %v585 = vlaneseq
    %v586 = vshrl.u32 %v585, 7
    %v587 = vsub.s32 %v584, %v586
    %v588 = vrot.slane %v473, %v587
    %vm589 = vcmask 917312
    %v590 = vsel %vm589, %v588, %v583
    %v591 = vadd.s32 %v495, 4294967184
    %v592 = vlaneseq
    %v593 = vshrl.u32 %v592, 7
    %v594 = vsub.s32 %v591, %v593
    %v595 = vrot.slane %v475, %v594
    %vm596 = vcmask 982912
    %v597 = vsel %vm596, %v595, %v590
    %v598 = vadd.s32 %v495, 4294967176
    %v599 = vlaneseq
    %v600 = vshrl.u32 %v599, 7
    %v601 = vsub.s32 %v598, %v600
    %v602 = vrot.slane %v477, %v601
    %vm603 = vcmask 1048512
    %v604 = vsel %vm603, %v602, %v597
    %606 = vst [vmem:[#allocation8] sm:$0x1] %v604
    // Predicated region
    $region30: #{tpu_custom_call.1} parent=1 // pred_check
      _
    $region31: #{tpu_custom_call.1} parent=1 // pred_check_branch
      %608 = sbr.rel (0) target = $region33
    $region32: #{tpu_custom_call.1} parent=1 // pred_region
      %s610 = ssub.s32 16, 16
      %611 = vsyncadd [#allocation5], %s610
      %s613 = sshll.u32 [#allocation8], 4
      %s614 = int_to_ptr.vmem [resolvable:$true] %s613
      %616 = dma.vmem_to_hbm [thread:$0]  %s614, 16, %s5, [#allocation5]
    $region33: #{tpu_custom_call.1} parent=1 // pred_fallthru
      _
    // Predicated region
    $region34: #{tpu_custom_call.1} parent=1 // pred_check
      _
    $region35: #{tpu_custom_call.1} parent=1 // pred_check_branch
      %618 = sbr.rel (0) target = $region37
    $region36: #{tpu_custom_call.1} parent=1 // pred_region
      %619 = dma.done [#allocation5], 16
    $region37: #{tpu_custom_call.1} parent=1 // pred_fallthru
      _
    %620 = vsyncpa [#allocation4], 1
    %621 = vsyncpa [#allocation7], 1
    %622 = vsyncpa [#allocation5], 1

</llo_original>
